<compile_context>
chip_gen: v7x
topology: tpu7x:2x2x1
jax: 0.10.0
libtpu: 0.0.40
codegen_flags: <defaults>
</compile_context>

<pallas_src>
import functools

import jax
import jax.numpy as jnp
from jax.experimental import pallas as pl
from jax.experimental.pallas import tpu as pltpu


def _round_up(n, m):
    return ((n + m - 1) // m) * m


def _pick_batch_tile(V128, E128, vmem_budget=24 * 1024 * 1024):
    """Largest f32 batch tile (multiple of 8, <=512) fitting the VMEM budget."""
    resident = 2 * 4 * (2 * V128 * E128 + V128)        # AeqT + Pinv + mask (x2 buf)
    per_row = 4 * (2 * V128 + E128 + 3)                # x in/out, b, invn, eq, ineq
    tb = (vmem_budget - resident) // (2 * per_row)     # x2 for double buffering
    tb = max(8, min(512, (tb // 8) * 8))
    return int(tb)


# ---------------------------------------------------------------------------
# Kernel 1: stopping criterion only (used once, on the initial x)
#   r_i        = x_i @ A_eq^T - b_i                     (per-sample, no kron)
#   eq_eps_i   = ||r_i||_2 * 1/(1 + ||b_i||_2)          (reciprocal precomputed)
#   ineq_eps_i = ||relu(-x_i) * mask||_2
# ---------------------------------------------------------------------------
def _criterion_kernel(x_ref, AeqT_ref, b_ref, mask_ref, invn_ref,
                      eq_ref, ineq_ref):
    x = x_ref[...]                                              # (TB, V)
    r = jnp.dot(x, AeqT_ref[...],
                preferred_element_type=jnp.float32) - b_ref[...]  # (TB, E)
    eq_ref[...] = jnp.sqrt(jnp.sum(r * r, axis=-1, keepdims=True)) * invn_ref[...]
    iv = jnp.maximum(-x, 0.0) * mask_ref[...]                   # (1,V) broadcast
    ineq_ref[...] = jnp.sqrt(jnp.sum(iv * iv, axis=-1, keepdims=True))


# ---------------------------------------------------------------------------
# Kernel 2: fused POCS step + stopping criterion (one call per iteration)
#   x_eq  = x - (x @ A_eq^T - b) @ [(A_eq A_eq^T)^{-1} A_eq]   (eq projection)
#   x_new = where(mask, relu(x_eq), x_eq)                       (orthant proj.)
#   eq/ineq epsilons evaluated at x_new (A_eq^T already resident in VMEM)
# ---------------------------------------------------------------------------
def _fused_step_kernel(x_ref, AeqT_ref, Pinv_ref, b_ref, mask_ref, invn_ref,
                       xo_ref, eq_ref, ineq_ref):
    x = x_ref[...]                                              # (TB, V)
    AeqT = AeqT_ref[...]                                        # (V, E)
    b = b_ref[...]                                              # (TB, E)
    mask = mask_ref[...]                                        # (1, V)

    r = jnp.dot(x, AeqT, preferred_element_type=jnp.float32) - b
    x_eq = x - jnp.dot(r, Pinv_ref[...], preferred_element_type=jnp.float32)
    x_new = jnp.where(mask > 0.0, jnp.maximum(x_eq, 0.0), x_eq)
    xo_ref[...] = x_new

    r_new = jnp.dot(x_new, AeqT, preferred_element_type=jnp.float32) - b
    eq_ref[...] = (jnp.sqrt(jnp.sum(r_new * r_new, axis=-1, keepdims=True))
                   * invn_ref[...])
    iv = jnp.maximum(-x_new, 0.0) * mask
    ineq_ref[...] = jnp.sqrt(jnp.sum(iv * iv, axis=-1, keepdims=True))


def _compiler_params():
    return pltpu.CompilerParams(
        dimension_semantics=("parallel",),     # batch tiles shard across TCs (v7x)
        vmem_limit_bytes=48 * 1024 * 1024,     # headroom above default scoped limit
    )


def _criterion_call(x, AeqT, b, mask_f, invn, tb):
    B_pad, V = x.shape
    E = b.shape[-1]
    nb = B_pad // tb
    return pl.pallas_call(
        _criterion_kernel,
        out_shape=(jax.ShapeDtypeStruct((B_pad, 1), jnp.float32),
                   jax.ShapeDtypeStruct((B_pad, 1), jnp.float32)),
        grid_spec=pltpu.PrefetchScalarGridSpec(
            num_scalar_prefetch=0,
            grid=(nb,),
            in_specs=[
                pl.BlockSpec((tb, V), lambda i: (i, 0)),   # x tile
                pl.BlockSpec((V, E), lambda i: (0, 0)),    # AeqT (resident)
                pl.BlockSpec((tb, E), lambda i: (i, 0)),   # b tile
                pl.BlockSpec((1, V), lambda i: (0, 0)),    # mask (resident)
                pl.BlockSpec((tb, 1), lambda i: (i, 0)),   # 1/(1+||b||) tile
            ],
            out_specs=[
                pl.BlockSpec((tb, 1), lambda i: (i, 0)),
                pl.BlockSpec((tb, 1), lambda i: (i, 0)),
            ],
        ),
        compiler_params=_compiler_params(),
    )(x, AeqT, b, mask_f, invn)


def _fused_step_call(x, AeqT, Pinv, b, mask_f, invn, tb):
    B_pad, V = x.shape
    E = b.shape[-1]
    nb = B_pad // tb
    return pl.pallas_call(
        _fused_step_kernel,
        out_shape=(jax.ShapeDtypeStruct((B_pad, V), jnp.float32),
                   jax.ShapeDtypeStruct((B_pad, 1), jnp.float32),
                   jax.ShapeDtypeStruct((B_pad, 1), jnp.float32)),
        grid_spec=pltpu.PrefetchScalarGridSpec(
            num_scalar_prefetch=0,
            grid=(nb,),
            in_specs=[
                pl.BlockSpec((tb, V), lambda i: (i, 0)),   # x tile
                pl.BlockSpec((V, E), lambda i: (0, 0)),    # AeqT (resident)
                pl.BlockSpec((E, V), lambda i: (0, 0)),    # Pinv (resident)
                pl.BlockSpec((tb, E), lambda i: (i, 0)),   # b tile
                pl.BlockSpec((1, V), lambda i: (0, 0)),    # mask (resident)
                pl.BlockSpec((tb, 1), lambda i: (i, 0)),   # 1/(1+||b||) tile
            ],
            out_specs=[
                pl.BlockSpec((tb, V), lambda i: (i, 0)),
                pl.BlockSpec((tb, 1), lambda i: (i, 0)),
                pl.BlockSpec((tb, 1), lambda i: (i, 0)),
            ],
        ),
        compiler_params=_compiler_params(),
        input_output_aliases={0: 0},                       # reuse x's HBM buffer
    )(x, AeqT, Pinv, b, mask_f, invn)


@functools.partial(
    jax.jit,
    static_argnames=("eq_tol", "ineq_tol", "max_iters", "true_b", "tb"))
def _run_pocs(x0, AeqT, Pinv, b, mask_f, invn, *,
              eq_tol, ineq_tol, max_iters, true_b, tb):
    """Device-side POCS loop: criterion(x0), then step+criterion until tol."""
    eq0, ineq0 = _criterion_call(x0, AeqT, b, mask_f, invn, tb)

    def cond(carry):
        _, eq, ineq, it = carry
        eq_m = jnp.sum(eq[:true_b]) / true_b
        ineq_m = jnp.sum(ineq[:true_b]) / true_b
        return jnp.logical_and(
            jnp.logical_or(eq_m > eq_tol, ineq_m > ineq_tol),
            it < max_iters)

    def body(carry):
        x, _, _, it = carry
        x_new, eq, ineq = _fused_step_call(x, AeqT, Pinv, b, mask_f, invn, tb)
        return (x_new, eq, ineq, it + 1)

    return jax.lax.while_loop(cond, body, (x0, eq0, ineq0, jnp.int32(0)))


# ---------------------------------------------------------------------------
# FeasibilityNet wrapper (POCS branch)
# ---------------------------------------------------------------------------
class FeasibilityNet:
    def __init__(self, A_eq, eq_tol, ineq_tol, max_iters):
        self.algo_name = "POCS"
        self.eq_tol = float(eq_tol)
        self.ineq_tol = float(ineq_tol)
        self.max_iters = int(max_iters)
        self.iters = 0
        self.eq_epsilon = None
        self.ineq_epsilon = None

        A_eq = jnp.asarray(A_eq, jnp.float32)
        E, V = A_eq.shape
        self.E, self.V = E, V
        self.E128 = _round_up(E, 128)
        self.V128 = _round_up(V, 128)

        AeqT = A_eq.T                                           # (V, E)
        Pinv = jnp.linalg.solve(A_eq @ A_eq.T, A_eq)            # (E, V)
        # Zero-pad projector matrices to lane-aligned shapes. Kept in f32
        # (bf16 would halve resident VMEM but needs tolerance re-validation).
        self.AeqT = (jnp.zeros((self.V128, self.E128), jnp.float32)
                     .at[:V, :E].set(AeqT))
        self.Pinv = (jnp.zeros((self.E128, self.V128), jnp.float32)
                     .at[:E, :V].set(Pinv))

    def forward(self, x, b, nonnegative_mask):
        # Note: the dense block-diagonal A = kron(I_B, A_eq) of the reference
        # is never materialized: A @ x.flatten() == per-sample x @ A_eq^T.
        B, V = x.shape
        E = b.shape[-1]
        assert V == self.V and E == self.E

        tb = min(_pick_batch_tile(self.V128, self.E128), _round_up(B, 8))
        B_pad = _round_up(B, tb)

        # Zero-padded operands: padded rows/cols stay exactly zero through the
        # iteration and contribute 0 to all norms, so results are unchanged.
        x_p = jnp.zeros((B_pad, self.V128), jnp.float32).at[:B, :V].set(x)
        b_p = jnp.zeros((B_pad, self.E128), jnp.float32).at[:B, :E].set(b)
        mask_f = (jnp.zeros((1, self.V128), jnp.float32)
                  .at[0, :V].set(nonnegative_mask.astype(jnp.float32)))
        # loop-invariant 1 / (1 + ||b_i||_2), precomputed once
        bnorm = jnp.sqrt(jnp.sum(b_p * b_p, axis=-1, keepdims=True))
        invn = 1.0 / (1.0 + bnorm)

        x_out, eq, ineq, iters = _run_pocs(
            x_p, self.AeqT, self.Pinv, b_p, mask_f, invn,
            eq_tol=self.eq_tol, ineq_tol=self.ineq_tol,
            max_iters=self.max_iters, true_b=B, tb=tb)

        self.iters = int(iters)
        self.eq_epsilon = eq[:B, 0]
        self.ineq_epsilon = ineq[:B, 0]
        return x_out[:B, :V]


if __name__ == "__main__":
    B, V, E = 2, 32, 8          # batch, variables per sample, equalities per sample
    key = jax.random.PRNGKey(0)
    k1, k2, k3 = jax.random.split(key, 3)

    A_eq = jax.random.normal(k1, (E, V), dtype=jnp.float32)   # shared per-sample
    b = jax.random.normal(k2, (B, E), dtype=jnp.float32)
    x0 = jax.random.normal(k3, (B, V), dtype=jnp.float32)
    nonnegative_mask = (jnp.arange(V) % 2 == 0)               # every other variable

    net = FeasibilityNet(A_eq, eq_tol=1e-4, ineq_tol=1e-4, max_iters=50)
    x_out = net.forward(x0, b, nonnegative_mask)
    x_out = jax.block_until_ready(x_out)

    assert x_out.shape == (B, V)
    assert 0 <= net.iters <= net.max_iters

    # Cross-check the in-kernel stopping criterion at the returned x against
    # plain-JAX math (same formulas as the PyTorch reference).
    r_ref = x_out @ A_eq.T - b
    eq_ref = jnp.linalg.norm(r_ref, axis=-1) / (1.0 + jnp.linalg.norm(b, axis=-1))
    iv_ref = jnp.maximum(-x_out, 0.0) * nonnegative_mask.astype(jnp.float32)[None, :]
    ineq_ref = jnp.linalg.norm(iv_ref, axis=-1)
    assert jnp.allclose(net.eq_epsilon, eq_ref, atol=1e-3, rtol=5e-2)
    assert jnp.allclose(net.ineq_epsilon, ineq_ref, atol=1e-3, rtol=5e-2)

    print("KERNEL_OK")
</pallas_src>

<mosaic_0001>
module attributes {stable_mosaic.version = 11 : i64} {
  func.func @_criterion_kernel(%arg0: i32, %arg1: memref<8x128xf32, #tpu.memory_space<vmem>>, %arg2: memref<128x128xf32, #tpu.memory_space<vmem>>, %arg3: memref<8x128xf32, #tpu.memory_space<vmem>>, %arg4: memref<1x128xf32, #tpu.memory_space<vmem>>, %arg5: memref<8x1xf32, #tpu.memory_space<vmem>>, %arg6: memref<8x1xf32, #tpu.memory_space<vmem>>, %arg7: memref<8x1xf32, #tpu.memory_space<vmem>>) attributes {dimension_semantics = [#tpu.dimension_semantics<parallel>], iteration_bounds = array<i64: 1>, scalar_prefetch = 0 : i64, scratch_operands = 0 : i64, tpu.core_type = #tpu.core_type<tc>, window_params = [{transform_indices = @transform_0, window_bounds = array<i64: 8, 128>}, {pipeline_mode = #tpu.pipeline_mode<synchronous>, transform_indices = @transform_1, window_bounds = array<i64: 128, 128>}, {transform_indices = @transform_2, window_bounds = array<i64: 8, 128>}, {pipeline_mode = #tpu.pipeline_mode<synchronous>, transform_indices = @transform_3, window_bounds = array<i64: 1, 128>}, {transform_indices = @transform_4, window_bounds = array<i64: 8, 1>}, {transform_indices = @transform_5, window_bounds = array<i64: 8, 1>}, {transform_indices = @transform_6, window_bounds = array<i64: 8, 1>}]} {
    %c0 = arith.constant 0 : index
    %c0_0 = arith.constant 0 : index
    %0 = vector.load %arg1[%c0, %c0_0] : memref<8x128xf32, #tpu.memory_space<vmem>>, vector<8x128xf32>
    %c0_1 = arith.constant 0 : index
    %c0_2 = arith.constant 0 : index
    %1 = vector.load %arg2[%c0_1, %c0_2] : memref<128x128xf32, #tpu.memory_space<vmem>>, vector<128x128xf32>
    %cst = arith.constant dense<0.000000e+00> : vector<8x128xf32>
    %2 = tpu.matmul %0, %1, %cst {dimension_numbers = #tpu.dot_dimension_numbers<[1], [0], [0], [1], [0, 0, 1, 1], [], []>} : vector<8x128xf32>, vector<128x128xf32>, vector<8x128xf32> -> vector<8x128xf32>
    %c0_3 = arith.constant 0 : index
    %c0_4 = arith.constant 0 : index
    %3 = vector.load %arg3[%c0_3, %c0_4] : memref<8x128xf32, #tpu.memory_space<vmem>>, vector<8x128xf32>
    %4 = arith.subf %2, %3 : vector<8x128xf32>
    %5 = arith.mulf %4, %4 : vector<8x128xf32>
    %cst_5 = arith.constant dense<0.000000e+00> : vector<8xf32>
    %6 = vector.multi_reduction <add>, %5, %cst_5 [1] : vector<8x128xf32> to vector<8xf32>
    %7 = vector.shape_cast %6 : vector<8xf32> to vector<8x1xf32>
    %8 = math.sqrt %7 : vector<8x1xf32>
    %c0_6 = arith.constant 0 : index
    %c0_7 = arith.constant 0 : index
    %9 = vector.load %arg5[%c0_6, %c0_7] : memref<8x1xf32, #tpu.memory_space<vmem>>, vector<8x1xf32>
    %10 = arith.mulf %8, %9 : vector<8x1xf32>
    %c0_8 = arith.constant 0 : index
    %c0_9 = arith.constant 0 : index
    %11 = vector.load %arg6[%c0_8, %c0_9] : memref<8x1xf32, #tpu.memory_space<vmem>>, vector<8x1xf32>
    tpu.vector_store %arg6[%c0_8, %c0_9], %10 {strides = array<i32>} : memref<8x1xf32, #tpu.memory_space<vmem>>, vector<8x1xf32>,
    %cst_10 = arith.constant 0.000000e+00 : f32
    %12 = vector.broadcast %cst_10 : f32 to vector<8x128xf32>
    %13 = arith.subf %12, %0 : vector<8x128xf32>
    %cst_11 = arith.constant 0.000000e+00 : f32
    %14 = vector.broadcast %cst_11 : f32 to vector<8x128xf32>
    %15 = arith.maximumf %13, %14 : vector<8x128xf32>
    %c0_12 = arith.constant 0 : index
    %c0_13 = arith.constant 0 : index
    %16 = vector.load %arg4[%c0_12, %c0_13] : memref<1x128xf32, #tpu.memory_space<vmem>>, vector<1x128xf32>
    %17 = vector.broadcast %16 : vector<1x128xf32> to vector<8x128xf32>
    %18 = arith.mulf %15, %17 : vector<8x128xf32>
    %19 = arith.mulf %18, %18 : vector<8x128xf32>
    %cst_14 = arith.constant dense<0.000000e+00> : vector<8xf32>
    %20 = vector.multi_reduction <add>, %19, %cst_14 [1] : vector<8x128xf32> to vector<8xf32>
    %21 = vector.shape_cast %20 : vector<8xf32> to vector<8x1xf32>
    %22 = math.sqrt %21 : vector<8x1xf32>
    %c0_15 = arith.constant 0 : index
    %c0_16 = arith.constant 0 : index
    %23 = vector.load %arg7[%c0_15, %c0_16] : memref<8x1xf32, #tpu.memory_space<vmem>>, vector<8x1xf32>
    tpu.vector_store %arg7[%c0_15, %c0_16], %22 {strides = array<i32>} : memref<8x1xf32, #tpu.memory_space<vmem>>, vector<8x1xf32>,
    return
  }
  func.func @transform_0(%arg0: i32) -> (i32, i32) {
    %c0_i32 = arith.constant 0 : i32
    %c0_i32_0 = arith.constant 0 : i32
    return %arg0, %c0_i32 : i32, i32
  }
  func.func @transform_1(%arg0: i32) -> (i32, i32) {
    %c0_i32 = arith.constant 0 : i32
    %c0_i32_0 = arith.constant 0 : i32
    %c0_i32_1 = arith.constant 0 : i32
    return %c0_i32, %c0_i32_0 : i32, i32
  }
  func.func @transform_2(%arg0: i32) -> (i32, i32) {
    %c0_i32 = arith.constant 0 : i32
    %c0_i32_0 = arith.constant 0 : i32
    return %arg0, %c0_i32 : i32, i32
  }
  func.func @transform_3(%arg0: i32) -> (i32, i32) {
    %c0_i32 = arith.constant 0 : i32
    %c0_i32_0 = arith.constant 0 : i32
    %c0_i32_1 = arith.constant 0 : i32
    return %c0_i32, %c0_i32_0 : i32, i32
  }
  func.func @transform_4(%arg0: i32) -> (i32, i32) {
    %c0_i32 = arith.constant 0 : i32
    %c0_i32_0 = arith.constant 0 : i32
    return %arg0, %c0_i32 : i32, i32
  }
  func.func @transform_5(%arg0: i32) -> (i32, i32) {
    %c0_i32 = arith.constant 0 : i32
    %c0_i32_0 = arith.constant 0 : i32
    return %arg0, %c0_i32 : i32, i32
  }
  func.func @transform_6(%arg0: i32) -> (i32, i32) {
    %c0_i32 = arith.constant 0 : i32
    %c0_i32_0 = arith.constant 0 : i32
    return %arg0, %c0_i32 : i32, i32
  }
}

module attributes {stable_mosaic.version = 11 : i64} {
  func.func @_fused_step_kernel(%arg0: i32, %arg1: memref<8x128xf32, #tpu.memory_space<vmem>>, %arg2: memref<128x128xf32, #tpu.memory_space<vmem>>, %arg3: memref<128x128xf32, #tpu.memory_space<vmem>>, %arg4: memref<8x128xf32, #tpu.memory_space<vmem>>, %arg5: memref<1x128xf32, #tpu.memory_space<vmem>>, %arg6: memref<8x1xf32, #tpu.memory_space<vmem>>, %arg7: memref<8x128xf32, #tpu.memory_space<vmem>>, %arg8: memref<8x1xf32, #tpu.memory_space<vmem>>, %arg9: memref<8x1xf32, #tpu.memory_space<vmem>>) attributes {dimension_semantics = [#tpu.dimension_semantics<parallel>], iteration_bounds = array<i64: 1>, scalar_prefetch = 0 : i64, scratch_operands = 0 : i64, tpu.core_type = #tpu.core_type<tc>, window_params = [{transform_indices = @transform_0, window_bounds = array<i64: 8, 128>}, {pipeline_mode = #tpu.pipeline_mode<synchronous>, transform_indices = @transform_1, window_bounds = array<i64: 128, 128>}, {pipeline_mode = #tpu.pipeline_mode<synchronous>, transform_indices = @transform_2, window_bounds = array<i64: 128, 128>}, {transform_indices = @transform_3, window_bounds = array<i64: 8, 128>}, {pipeline_mode = #tpu.pipeline_mode<synchronous>, transform_indices = @transform_4, window_bounds = array<i64: 1, 128>}, {transform_indices = @transform_5, window_bounds = array<i64: 8, 1>}, {transform_indices = @transform_6, window_bounds = array<i64: 8, 128>}, {transform_indices = @transform_7, window_bounds = array<i64: 8, 1>}, {transform_indices = @transform_8, window_bounds = array<i64: 8, 1>}]} {
    %c0 = arith.constant 0 : index
    %c0_0 = arith.constant 0 : index
    %0 = vector.load %arg1[%c0, %c0_0] : memref<8x128xf32, #tpu.memory_space<vmem>>, vector<8x128xf32>
    %c0_1 = arith.constant 0 : index
    %c0_2 = arith.constant 0 : index
    %1 = vector.load %arg2[%c0_1, %c0_2] : memref<128x128xf32, #tpu.memory_space<vmem>>, vector<128x128xf32>
    %c0_3 = arith.constant 0 : index
    %c0_4 = arith.constant 0 : index
    %2 = vector.load %arg4[%c0_3, %c0_4] : memref<8x128xf32, #tpu.memory_space<vmem>>, vector<8x128xf32>
    %c0_5 = arith.constant 0 : index
    %c0_6 = arith.constant 0 : index
    %3 = vector.load %arg5[%c0_5, %c0_6] : memref<1x128xf32, #tpu.memory_space<vmem>>, vector<1x128xf32>
    %cst = arith.constant dense<0.000000e+00> : vector<8x128xf32>
    %4 = tpu.matmul %0, %1, %cst {dimension_numbers = #tpu.dot_dimension_numbers<[1], [0], [0], [1], [0, 0, 1, 1], [], []>} : vector<8x128xf32>, vector<128x128xf32>, vector<8x128xf32> -> vector<8x128xf32>
    %5 = arith.subf %4, %2 : vector<8x128xf32>
    %c0_7 = arith.constant 0 : index
    %c0_8 = arith.constant 0 : index
    %6 = vector.load %arg3[%c0_7, %c0_8] : memref<128x128xf32, #tpu.memory_space<vmem>>, vector<128x128xf32>
    %cst_9 = arith.constant dense<0.000000e+00> : vector<8x128xf32>
    %7 = tpu.matmul %5, %6, %cst_9 {dimension_numbers = #tpu.dot_dimension_numbers<[1], [0], [0], [1], [0, 0, 1, 1], [], []>} : vector<8x128xf32>, vector<128x128xf32>, vector<8x128xf32> -> vector<8x128xf32>
    %8 = arith.subf %0, %7 : vector<8x128xf32>
    %cst_10 = arith.constant 0.000000e+00 : f32
    %9 = vector.broadcast %cst_10 : f32 to vector<1x128xf32>
    %10 = arith.cmpf ogt, %3, %9 : vector<1x128xf32>
    %cst_11 = arith.constant 0.000000e+00 : f32
    %11 = vector.broadcast %cst_11 : f32 to vector<8x128xf32>
    %12 = arith.maximumf %8, %11 : vector<8x128xf32>
    %13 = vector.shape_cast %10 : vector<1x128xi1> to vector<1x128xi1>
    %14 = vector.broadcast %13 : vector<1x128xi1> to vector<8x128xi1>
    %15 = arith.select %14, %12, %8 : vector<8x128xi1>, vector<8x128xf32>
    %c0_12 = arith.constant 0 : index
    %c0_13 = arith.constant 0 : index
    %16 = vector.load %arg7[%c0_12, %c0_13] : memref<8x128xf32, #tpu.memory_space<vmem>>, vector<8x128xf32>
    tpu.vector_store %arg7[%c0_12, %c0_13], %15 {strides = array<i32>} : memref<8x128xf32, #tpu.memory_space<vmem>>, vector<8x128xf32>,
    %cst_14 = arith.constant dense<0.000000e+00> : vector<8x128xf32>
    %17 = tpu.matmul %15, %1, %cst_14 {dimension_numbers = #tpu.dot_dimension_numbers<[1], [0], [0], [1], [0, 0, 1, 1], [], []>} : vector<8x128xf32>, vector<128x128xf32>, vector<8x128xf32> -> vector<8x128xf32>
    %18 = arith.subf %17, %2 : vector<8x128xf32>
    %19 = arith.mulf %18, %18 : vector<8x128xf32>
    %cst_15 = arith.constant dense<0.000000e+00> : vector<8xf32>
    %20 = vector.multi_reduction <add>, %19, %cst_15 [1] : vector<8x128xf32> to vector<8xf32>
    %21 = vector.shape_cast %20 : vector<8xf32> to vector<8x1xf32>
    %22 = math.sqrt %21 : vector<8x1xf32>
    %c0_16 = arith.constant 0 : index
    %c0_17 = arith.constant 0 : index
    %23 = vector.load %arg6[%c0_16, %c0_17] : memref<8x1xf32, #tpu.memory_space<vmem>>, vector<8x1xf32>
    %24 = arith.mulf %22, %23 : vector<8x1xf32>
    %c0_18 = arith.constant 0 : index
    %c0_19 = arith.constant 0 : index
    %25 = vector.load %arg8[%c0_18, %c0_19] : memref<8x1xf32, #tpu.memory_space<vmem>>, vector<8x1xf32>
    tpu.vector_store %arg8[%c0_18, %c0_19], %24 {strides = array<i32>} : memref<8x1xf32, #tpu.memory_space<vmem>>, vector<8x1xf32>,
    %cst_20 = arith.constant 0.000000e+00 : f32
    %26 = vector.broadcast %cst_20 : f32 to vector<8x128xf32>
    %27 = arith.subf %26, %15 : vector<8x128xf32>
    %cst_21 = arith.constant 0.000000e+00 : f32
    %28 = vector.broadcast %cst_21 : f32 to vector<8x128xf32>
    %29 = arith.maximumf %27, %28 : vector<8x128xf32>
    %30 = vector.broadcast %3 : vector<1x128xf32> to vector<8x128xf32>
    %31 = arith.mulf %29, %30 : vector<8x128xf32>
    %32 = arith.mulf %31, %31 : vector<8x128xf32>
    %cst_22 = arith.constant dense<0.000000e+00> : vector<8xf32>
    %33 = vector.multi_reduction <add>, %32, %cst_22 [1] : vector<8x128xf32> to vector<8xf32>
    %34 = vector.shape_cast %33 : vector<8xf32> to vector<8x1xf32>
    %35 = math.sqrt %34 : vector<8x1xf32>
    %c0_23 = arith.constant 0 : index
    %c0_24 = arith.constant 0 : index
    %36 = vector.load %arg9[%c0_23, %c0_24] : memref<8x1xf32, #tpu.memory_space<vmem>>, vector<8x1xf32>
    tpu.vector_store %arg9[%c0_23, %c0_24], %35 {strides = array<i32>} : memref<8x1xf32, #tpu.memory_space<vmem>>, vector<8x1xf32>,
    return
  }
  func.func @transform_0(%arg0: i32) -> (i32, i32) {
    %c0_i32 = arith.constant 0 : i32
    %c0_i32_0 = arith.constant 0 : i32
    return %arg0, %c0_i32 : i32, i32
  }
  func.func @transform_1(%arg0: i32) -> (i32, i32) {
    %c0_i32 = arith.constant 0 : i32
    %c0_i32_0 = arith.constant 0 : i32
    %c0_i32_1 = arith.constant 0 : i32
    return %c0_i32, %c0_i32_0 : i32, i32
  }
  func.func @transform_2(%arg0: i32) -> (i32, i32) {
    %c0_i32 = arith.constant 0 : i32
    %c0_i32_0 = arith.constant 0 : i32
    %c0_i32_1 = arith.constant 0 : i32
    return %c0_i32, %c0_i32_0 : i32, i32
  }
  func.func @transform_3(%arg0: i32) -> (i32, i32) {
    %c0_i32 = arith.constant 0 : i32
    %c0_i32_0 = arith.constant 0 : i32
    return %arg0, %c0_i32 : i32, i32
  }
  func.func @transform_4(%arg0: i32) -> (i32, i32) {
    %c0_i32 = arith.constant 0 : i32
    %c0_i32_0 = arith.constant 0 : i32
    %c0_i32_1 = arith.constant 0 : i32
    return %c0_i32, %c0_i32_0 : i32, i32
  }
  func.func @transform_5(%arg0: i32) -> (i32, i32) {
    %c0_i32 = arith.constant 0 : i32
    %c0_i32_0 = arith.constant 0 : i32
    return %arg0, %c0_i32 : i32, i32
  }
  func.func @transform_6(%arg0: i32) -> (i32, i32) {
    %c0_i32 = arith.constant 0 : i32
    %c0_i32_0 = arith.constant 0 : i32
    return %arg0, %c0_i32 : i32, i32
  }
  func.func @transform_7(%arg0: i32) -> (i32, i32) {
    %c0_i32 = arith.constant 0 : i32
    %c0_i32_0 = arith.constant 0 : i32
    return %arg0, %c0_i32 : i32, i32
  }
  func.func @transform_8(%arg0: i32) -> (i32, i32) {
    %c0_i32 = arith.constant 0 : i32
    %c0_i32_0 = arith.constant 0 : i32
    return %arg0, %c0_i32 : i32, i32
  }
}

</mosaic_0001>

<llo_original>
// kernel: _run_pocs.1
$region0: #{_run_pocs.1}
  #allocation0 [shape = 'u32[]', space=smem, size = 0x4, offset = 0x4, fixed_abs, tag = 'smem constant byte address 0x4 - core index']
  #allocation1 [shape = 'u32[144,128]{1,0:T(1,128)}', space=vmem, size = 0x12000, scoped, tag = 'internal scratch']
  %s0 = inlined_call_operand.vmem [shape: f32[8,128], index: 0, kind: input, shape index: {}]
  %s1 = inlined_call_operand.hbm [shape: f32[128,128], index: 1, kind: input, shape index: {}]
  %s2 = inlined_call_operand.vmem [shape: f32[8,128], index: 2, kind: input, shape index: {}]
  %s3 = inlined_call_operand.vmem [shape: f32[1,128], index: 3, kind: input, shape index: {}]
  %s4 = inlined_call_operand.vmem [shape: f32[8,1], index: 4, kind: input, shape index: {}]
  %s5 = inlined_call_operand.hbm [shape: f32[8,1], index: 5, kind: output, shape index: {0}]
  %s6 = inlined_call_operand.hbm [shape: f32[8,1], index: 6, kind: output, shape index: {1}]
  %7 = xla_tuple %s5, %s6
  %s8 = sld [smem:[#allocation0]]
  $region42: #{_run_pocs.1} parent=0
    _
  %s10 = ssub.s32 1, %s8
  %s11 = scalar_select 0, %s10, %s8
  $region1: #{_run_pocs.1} parent=0
    #allocation2 [shape = 'u8[65536]{0}', space=vmem, size = 0x10000, scoped, tag = 'input window, operand 1, single buffered']
    #allocation3 [shape = 's32[1]{0}', space=sflag, size = 0x4, scoped, tag = 'scoped memory for _run_pocs.1']
    #allocation4 [shape = 's32[1]{0}', space=sflag, size = 0x4, scoped, tag = 'scoped memory for _run_pocs.1']
    #allocation5 [shape = 'u8[4096]{0}', space=vmem, size = 0x1000, scoped, tag = 'output window, operand 0, single buffered']
    #allocation6 [shape = 'u8[4096]{0}', space=vmem, size = 0x1000, scoped, tag = 'output window, operand 1, single buffered']
    #allocation7 [shape = 's32[1]{0}', space=sflag, size = 0x4, scoped, tag = 'scoped memory for _run_pocs.1']
    %12 = vsyncpa [#allocation3], 0
    %13 = vsyncpa [#allocation4], 0
    %14 = vsyncpa [#allocation7], 0
    // Predicated region
    $region2: #{_run_pocs.1} parent=1 // pred_check
      _
    $region3: #{_run_pocs.1} parent=1 // pred_check_branch
      %16 = sbr.rel (0) target = $region5
    $region4: #{_run_pocs.1} parent=1 // pred_region
      _
    $region5: #{_run_pocs.1} parent=1 // pred_fallthru
      _
    // Predicated region
    $region6: #{_run_pocs.1} parent=1 // pred_check
      _
    $region7: #{_run_pocs.1} parent=1 // pred_check_branch
      %18 = sbr.rel (0) target = $region9
    $region8: #{_run_pocs.1} parent=1 // pred_region
      %s20 = ssub.s32 2048, 2048
      %21 = vsyncadd [#allocation3], %s20
      %s22 = sshll.u32 [#allocation2], 4
      %s23 = int_to_ptr.vmem [resolvable:$true] %s22
      %28 = dma.hbm_to_vmem [thread:$0]  %s1, 2048, %s23, [#allocation3], 128, 128, 8
    $region9: #{_run_pocs.1} parent=1 // pred_fallthru
      _
    // Predicated region
    $region10: #{_run_pocs.1} parent=1 // pred_check
      _
    $region11: #{_run_pocs.1} parent=1 // pred_check_branch
      %30 = sbr.rel (0) target = $region13
    $region12: #{_run_pocs.1} parent=1 // pred_region
      _
    $region13: #{_run_pocs.1} parent=1 // pred_fallthru
      _
    // Predicated region
    $region14: #{_run_pocs.1} parent=1 // pred_check
      _
    $region15: #{_run_pocs.1} parent=1 // pred_check_branch
      %32 = sbr.rel (0) target = $region17
    $region16: #{_run_pocs.1} parent=1 // pred_region
      _
    $region17: #{_run_pocs.1} parent=1 // pred_fallthru
      _
    // Predicated region
    $region18: #{_run_pocs.1} parent=1 // pred_check
      _
    $region19: #{_run_pocs.1} parent=1 // pred_check_branch
      %34 = sbr.rel (0) target = $region21
    $region20: #{_run_pocs.1} parent=1 // pred_region
      _
    $region21: #{_run_pocs.1} parent=1 // pred_fallthru
      _
    // Predicated region
    $region22: #{_run_pocs.1} parent=1 // pred_check
      _
    $region23: #{_run_pocs.1} parent=1 // pred_check_branch
      %36 = sbr.rel (0) target = $region25
    $region24: #{_run_pocs.1} parent=1 // pred_region
      %37 = dma.done [#allocation3], 2048
    $region25: #{_run_pocs.1} parent=1 // pred_fallthru
      _
    %v38 = vld [vmem:[%s0] sm:$0xff]
    %v39 = vld [vmem:[#allocation2] sm:$0xff]
    %v40 = vld [vmem:[#allocation2 + $0x8] sm:$0xff]
    %v41 = vld [vmem:[#allocation2 + $0x10] sm:$0xff]
    %v42 = vld [vmem:[#allocation2 + $0x18] sm:$0xff]
    %v43 = vld [vmem:[#allocation2 + $0x20] sm:$0xff]
    %v44 = vld [vmem:[#allocation2 + $0x28] sm:$0xff]
    %v45 = vld [vmem:[#allocation2 + $0x30] sm:$0xff]
    %v46 = vld [vmem:[#allocation2 + $0x38] sm:$0xff]
    %v47 = vld [vmem:[#allocation2 + $0x40] sm:$0xff]
    %v48 = vld [vmem:[#allocation2 + $0x48] sm:$0xff]
    %v49 = vld [vmem:[#allocation2 + $0x50] sm:$0xff]
    %v50 = vld [vmem:[#allocation2 + $0x58] sm:$0xff]
    %v51 = vld [vmem:[#allocation2 + $0x60] sm:$0xff]
    %v52 = vld [vmem:[#allocation2 + $0x68] sm:$0xff]
    %v53 = vld [vmem:[#allocation2 + $0x70] sm:$0xff]
    %v54 = vld [vmem:[#allocation2 + $0x78] sm:$0xff]
    %55 = vmatprep.subr.mxu0 0.0
    %56 = vmatpush1.msra.mxu0 %v39
    %57 = vmatprep.subr.mxu0 0.0
    %58 = vmatpush1.msra.mxu0 %v40
    %59 = vmatprep.subr.mxu0 0.0
    %60 = vmatpush1.msra.mxu0 %v41
    %61 = vmatprep.subr.mxu0 0.0
    %62 = vmatpush1.msra.mxu0 %v42
    %63 = vmatprep.subr.mxu0 0.0
    %64 = vmatpush1.msra.mxu0 %v43
    %65 = vmatprep.subr.mxu0 0.0
    %66 = vmatpush1.msra.mxu0 %v44
    %67 = vmatprep.subr.mxu0 0.0
    %68 = vmatpush1.msra.mxu0 %v45
    %69 = vmatprep.subr.mxu0 0.0
    %70 = vmatpush1.msra.mxu0 %v46
    %71 = vmatprep.subr.mxu0 0.0
    %72 = vmatpush1.msra.mxu0 %v47
    %73 = vmatprep.subr.mxu0 0.0
    %74 = vmatpush1.msra.mxu0 %v48
    %75 = vmatprep.subr.mxu0 0.0
    %76 = vmatpush1.msra.mxu0 %v49
    %77 = vmatprep.subr.mxu0 0.0
    %78 = vmatpush1.msra.mxu0 %v50
    %79 = vmatprep.subr.mxu0 0.0
    %80 = vmatpush1.msra.mxu0 %v51
    %81 = vmatprep.subr.mxu0 0.0
    %82 = vmatpush1.msra.mxu0 %v52
    %83 = vmatprep.subr.mxu0 0.0
    %84 = vmatpush1.msra.mxu0 %v53
    %85 = vmatprep.subr.mxu0 0.0
    %86 = vmatpush1.msra.mxu0 %v54
    %87 = vmatprep.subr.mxu0 0.0
    %88 = vmatpush1.msra.mxu0 0.0
    %89 = vmatprep.subr.mxu0 0.0
    %90 = vmatpush1.msra.mxu0 0.0
    %91 = vmatprep.subr.mxu0 0.0
    %92 = vmatpush1.msra.mxu0 0.0
    %93 = vmatprep.subr.mxu0 0.0
    %94 = vmatpush1.msra.mxu0 0.0
    %95 = vmatprep.subr.mxu0 0.0
    %96 = vmatpush1.msra.mxu0 0.0
    %97 = vmatprep.subr.mxu0 0.0
    %98 = vmatpush1.msra.mxu0 0.0
    %99 = vmatprep.subr.mxu0 0.0
    %100 = vmatpush1.msra.mxu0 0.0
    %101 = vmatprep.subr.mxu0 0.0
    %102 = vmatpush1.msra.mxu0 0.0
    %103 = vmatprep.subr.mxu0 0.0
    %104 = vmatpush1.msra.mxu0 0.0
    %105 = vmatprep.subr.mxu0 0.0
    %106 = vmatpush1.msra.mxu0 0.0
    %107 = vmatprep.subr.mxu0 0.0
    %108 = vmatpush1.msra.mxu0 0.0
    %109 = vmatprep.subr.mxu0 0.0
    %110 = vmatpush1.msra.mxu0 0.0
    %111 = vmatprep.subr.mxu0 0.0
    %112 = vmatpush1.msra.mxu0 0.0
    %113 = vmatprep.subr.mxu0 0.0
    %114 = vmatpush1.msra.mxu0 0.0
    %115 = vmatprep.subr.mxu0 0.0
    %116 = vmatpush1.msra.mxu0 0.0
    %117 = vmatprep.subr.mxu0 0.0
    %118 = vmatpush1.msra.mxu0 0.0
    %119 = vmatprep.mubr.f32.mxu0 0.0
    %120 = vmatmul.mubr.f32.gmra.mrb[0].mxu0 %v38
    %v121 = vpop.f32.mrb[0].mxu0
    %v122 = vadd.f32 0.0, %v121
    %v123 = vpop.f32.mrb[0].mxu0
    %124 = vdwg.mxu0
    %v125 = vld [vmem:[%s2] sm:$0xff]
    %v126 = vsub.f32 %v122, %v125
    %v127 = vmul.f32 %v126, %v126
    %128 = vadd.xlane.f32.xlu0 %v127
    %v129 = vpop.xlane.xlu0 %128
    %v130 = vrsqrt.pop %v129
    %v131 = vmul.f32 %v129, %v130
    %vm132 = vcmp.eq.f32.partialorder %v129, inf
    %v133 = vsel %vm132, %v129, %v131
    %vm134 = vcmp.eq.f32.partialorder %v129, 0.0
    %v135 = vand.u32 %v129, 2147483648
    %v136 = vsel %vm134, %v135, %v133
    %v137 = vld [vmem:[%s4] sm:$0xff]
    %v138 = vmul.f32 %v136, %v137
    %vm139 = vcmask 7168
    %140 = vst.msk [vmem:[#allocation5] sm:$0xff] %vm139, %v138
    %v141 = vsub.f32 0.0, %v38
    %v142 = vmax.f32 %v141, 0.0
    %v143 = vld [vmem:[%s3] sm:$0x1]
    %v145 = vlaneseq
    %v146 = vshrl.u32 %v145, 7
    %v147 = vsub.s32 0, %v146
    %v148 = vrot.slane %v143, %v147
    %v150 = vmul.f32 %v142, %v148
    %v151 = vmul.f32 %v150, %v150
    %152 = vadd.xlane.f32.xlu0 %v151
    %v153 = vpop.xlane.xlu0 %152
    %v154 = vrsqrt.pop %v153
    %v155 = vmul.f32 %v153, %v154
    %vm156 = vcmp.eq.f32.partialorder %v153, inf
    %v157 = vsel %vm156, %v153, %v155
    %vm158 = vcmp.eq.f32.partialorder %v153, 0.0
    %v159 = vand.u32 %v153, 2147483648
    %v160 = vsel %vm158, %v159, %v157
    %161 = vst.msk [vmem:[#allocation6] sm:$0xff] %vm139, %v160
    // Predicated region
    $region26: #{_run_pocs.1} parent=1 // pred_check
      _
    $region27: #{_run_pocs.1} parent=1 // pred_check_branch
      %163 = sbr.rel (0) target = $region29
    $region28: #{_run_pocs.1} parent=1 // pred_region
      %s165 = ssub.s32 128, 128
      %166 = vsyncadd [#allocation4], %s165
      %s168 = sshll.u32 [#allocation5], 4
      %s169 = int_to_ptr.vmem [resolvable:$true] %s168
      %171 = dma.vmem_to_hbm [thread:$0]  %s169, 128, %s5, [#allocation4]
    $region29: #{_run_pocs.1} parent=1 // pred_fallthru
      _
    // Predicated region
    $region30: #{_run_pocs.1} parent=1 // pred_check
      _
    $region31: #{_run_pocs.1} parent=1 // pred_check_branch
      %173 = sbr.rel (0) target = $region33
    $region32: #{_run_pocs.1} parent=1 // pred_region
      %s175 = ssub.s32 128, 128
      %176 = vsyncadd [#allocation7], %s175
      %s178 = sshll.u32 [#allocation6], 4
      %s179 = int_to_ptr.vmem [resolvable:$true] %s178
      %181 = dma.vmem_to_hbm [thread:$0]  %s179, 128, %s6, [#allocation7]
    $region33: #{_run_pocs.1} parent=1 // pred_fallthru
      _
    // Predicated region
    $region34: #{_run_pocs.1} parent=1 // pred_check
      _
    $region35: #{_run_pocs.1} parent=1 // pred_check_branch
      %183 = sbr.rel (0) target = $region37
    $region36: #{_run_pocs.1} parent=1 // pred_region
      %184 = dma.done [#allocation4], 128
    $region37: #{_run_pocs.1} parent=1 // pred_fallthru
      _
    // Predicated region
    $region38: #{_run_pocs.1} parent=1 // pred_check
      _
    $region39: #{_run_pocs.1} parent=1 // pred_check_branch
      %186 = sbr.rel (0) target = $region41
    $region40: #{_run_pocs.1} parent=1 // pred_region
      %187 = dma.done [#allocation7], 128
    $region41: #{_run_pocs.1} parent=1 // pred_fallthru
      _
    %188 = vsyncpa [#allocation3], 1
    %189 = vsyncpa [#allocation4], 1
    %190 = vsyncpa [#allocation7], 1

// kernel: body.3
$region0: #{body.3}
  #allocation0 [shape = 'u32[]', space=smem, size = 0x4, offset = 0x4, fixed_abs, tag = 'smem constant byte address 0x4 - core index']
  #allocation1 [shape = 'u32[144,128]{1,0:T(1,128)}', space=vmem, size = 0x12000, scoped, tag = 'internal scratch']
  %s0 = inlined_call_operand.vmem [shape: f32[8,128], index: 0, kind: input, shape index: {}, may-alias: {0,6}]
  %s1 = inlined_call_operand.vmem [shape: f32[128,128], index: 1, kind: input, shape index: {}]
  %s2 = inlined_call_operand.hbm [shape: f32[128,128], index: 2, kind: input, shape index: {}]
  %s3 = inlined_call_operand.vmem [shape: f32[8,128], index: 3, kind: input, shape index: {}]
  %s4 = inlined_call_operand.vmem [shape: f32[1,128], index: 4, kind: input, shape index: {}]
  %s5 = inlined_call_operand.vmem [shape: f32[8,1], index: 5, kind: input, shape index: {}]
  %s6 = inlined_call_operand.vmem [shape: f32[8,128], index: 6, kind: output, shape index: {0}, may-alias: {0,6}]
  %s7 = inlined_call_operand.hbm [shape: f32[8,1], index: 7, kind: output, shape index: {1}]
  %s8 = inlined_call_operand.hbm [shape: f32[8,1], index: 8, kind: output, shape index: {2}]
  %9 = xla_tuple %s6, %s7, %s8
  %s10 = sld [smem:[#allocation0]]
  $region54: #{body.3} parent=0
    _
  %s12 = ssub.s32 1, %s10
  %s13 = scalar_select 0, %s12, %s10
  $region1: #{body.3} parent=0
    #allocation2 [shape = 'u8[65536]{0}', space=vmem, size = 0x10000, scoped, tag = 'input window, operand 2, single buffered']
    #allocation3 [shape = 's32[1]{0}', space=sflag, size = 0x4, scoped, tag = 'scoped memory for body.3']
    #allocation4 [shape = 's32[1]{0}', space=sflag, size = 0x4, scoped, tag = 'scoped memory for body.3']
    #allocation5 [shape = 'u8[4096]{0}', space=vmem, size = 0x1000, scoped, tag = 'output window, operand 1, single buffered']
    #allocation6 [shape = 'u8[4096]{0}', space=vmem, size = 0x1000, scoped, tag = 'output window, operand 2, single buffered']
    #allocation7 [shape = 's32[1]{0}', space=sflag, size = 0x4, scoped, tag = 'scoped memory for body.3']
    %14 = vsyncpa [#allocation3], 0
    %15 = vsyncpa [#allocation4], 0
    %16 = vsyncpa [#allocation7], 0
    // Predicated region
    $region2: #{body.3} parent=1 // pred_check
      _
    $region3: #{body.3} parent=1 // pred_check_branch
      %18 = sbr.rel (0) target = $region5
    $region4: #{body.3} parent=1 // pred_region
      _
    $region5: #{body.3} parent=1 // pred_fallthru
      _
    // Predicated region
    $region6: #{body.3} parent=1 // pred_check
      _
    $region7: #{body.3} parent=1 // pred_check_branch
      %20 = sbr.rel (0) target = $region9
    $region8: #{body.3} parent=1 // pred_region
      _
    $region9: #{body.3} parent=1 // pred_fallthru
      _
    // Predicated region
    $region10: #{body.3} parent=1 // pred_check
      _
    $region11: #{body.3} parent=1 // pred_check_branch
      %22 = sbr.rel (0) target = $region13
    $region12: #{body.3} parent=1 // pred_region
      %s24 = ssub.s32 2048, 2048
      %25 = vsyncadd [#allocation3], %s24
      %s26 = sshll.u32 [#allocation2], 4
      %s27 = int_to_ptr.vmem [resolvable:$true] %s26
      %32 = dma.hbm_to_vmem [thread:$0]  %s2, 2048, %s27, [#allocation3], 128, 128, 8
    $region13: #{body.3} parent=1 // pred_fallthru
      _
    // Predicated region
    $region14: #{body.3} parent=1 // pred_check
      _
    $region15: #{body.3} parent=1 // pred_check_branch
      %34 = sbr.rel (0) target = $region17
    $region16: #{body.3} parent=1 // pred_region
      _
    $region17: #{body.3} parent=1 // pred_fallthru
      _
    // Predicated region
    $region18: #{body.3} parent=1 // pred_check
      _
    $region19: #{body.3} parent=1 // pred_check_branch
      %36 = sbr.rel (0) target = $region21
    $region20: #{body.3} parent=1 // pred_region
      _
    $region21: #{body.3} parent=1 // pred_fallthru
      _
    // Predicated region
    $region22: #{body.3} parent=1 // pred_check
      _
    $region23: #{body.3} parent=1 // pred_check_branch
      %38 = sbr.rel (0) target = $region25
    $region24: #{body.3} parent=1 // pred_region
      _
    $region25: #{body.3} parent=1 // pred_fallthru
      _
    // Predicated region
    $region26: #{body.3} parent=1 // pred_check
      _
    $region27: #{body.3} parent=1 // pred_check_branch
      %40 = sbr.rel (0) target = $region29
    $region28: #{body.3} parent=1 // pred_region
      %41 = dma.done [#allocation3], 2048
    $region29: #{body.3} parent=1 // pred_fallthru
      _
    %v42 = vld [vmem:[%s0] sm:$0xff]
    %v43 = vld [vmem:[%s1] sm:$0xff]
    %v44 = vld [vmem:[%s1 + $0x8] sm:$0xff]
    %v45 = vld [vmem:[%s1 + $0x10] sm:$0xff]
    %v46 = vld [vmem:[%s1 + $0x18] sm:$0xff]
    %v47 = vld [vmem:[%s1 + $0x20] sm:$0xff]
    %v48 = vld [vmem:[%s1 + $0x28] sm:$0xff]
    %v49 = vld [vmem:[%s1 + $0x30] sm:$0xff]
    %v50 = vld [vmem:[%s1 + $0x38] sm:$0xff]
    %v51 = vld [vmem:[%s1 + $0x40] sm:$0xff]
    %v52 = vld [vmem:[%s1 + $0x48] sm:$0xff]
    %v53 = vld [vmem:[%s1 + $0x50] sm:$0xff]
    %v54 = vld [vmem:[%s1 + $0x58] sm:$0xff]
    %v55 = vld [vmem:[%s1 + $0x60] sm:$0xff]
    %v56 = vld [vmem:[%s1 + $0x68] sm:$0xff]
    %v57 = vld [vmem:[%s1 + $0x70] sm:$0xff]
    %v58 = vld [vmem:[%s1 + $0x78] sm:$0xff]
    %v59 = vld [vmem:[%s3] sm:$0xff]
    %v60 = vld [vmem:[%s4] sm:$0x1]
    %61 = vmatprep.subr.mxu0 0.0
    %62 = vmatpush1.msra.mxu0 %v43
    %63 = vmatprep.subr.mxu0 0.0
    %64 = vmatpush1.msra.mxu0 %v44
    %65 = vmatprep.subr.mxu0 0.0
    %66 = vmatpush1.msra.mxu0 %v45
    %67 = vmatprep.subr.mxu0 0.0
    %68 = vmatpush1.msra.mxu0 %v46
    %69 = vmatprep.subr.mxu0 0.0
    %70 = vmatpush1.msra.mxu0 %v47
    %71 = vmatprep.subr.mxu0 0.0
    %72 = vmatpush1.msra.mxu0 %v48
    %73 = vmatprep.subr.mxu0 0.0
    %74 = vmatpush1.msra.mxu0 %v49
    %75 = vmatprep.subr.mxu0 0.0
    %76 = vmatpush1.msra.mxu0 %v50
    %77 = vmatprep.subr.mxu0 0.0
    %78 = vmatpush1.msra.mxu0 %v51
    %79 = vmatprep.subr.mxu0 0.0
    %80 = vmatpush1.msra.mxu0 %v52
    %81 = vmatprep.subr.mxu0 0.0
    %82 = vmatpush1.msra.mxu0 %v53
    %83 = vmatprep.subr.mxu0 0.0
    %84 = vmatpush1.msra.mxu0 %v54
    %85 = vmatprep.subr.mxu0 0.0
    %86 = vmatpush1.msra.mxu0 %v55
    %87 = vmatprep.subr.mxu0 0.0
    %88 = vmatpush1.msra.mxu0 %v56
    %89 = vmatprep.subr.mxu0 0.0
    %90 = vmatpush1.msra.mxu0 %v57
    %91 = vmatprep.subr.mxu0 0.0
    %92 = vmatpush1.msra.mxu0 %v58
    %93 = vmatprep.subr.mxu0 0.0
    %94 = vmatpush1.msra.mxu0 0.0
    %95 = vmatprep.subr.mxu0 0.0
    %96 = vmatpush1.msra.mxu0 0.0
    %97 = vmatprep.subr.mxu0 0.0
    %98 = vmatpush1.msra.mxu0 0.0
    %99 = vmatprep.subr.mxu0 0.0
    %100 = vmatpush1.msra.mxu0 0.0
    %101 = vmatprep.subr.mxu0 0.0
    %102 = vmatpush1.msra.mxu0 0.0
    %103 = vmatprep.subr.mxu0 0.0
    %104 = vmatpush1.msra.mxu0 0.0
    %105 = vmatprep.subr.mxu0 0.0
    %106 = vmatpush1.msra.mxu0 0.0
    %107 = vmatprep.subr.mxu0 0.0
    %108 = vmatpush1.msra.mxu0 0.0
    %109 = vmatprep.subr.mxu0 0.0
    %110 = vmatpush1.msra.mxu0 0.0
    %111 = vmatprep.subr.mxu0 0.0
    %112 = vmatpush1.msra.mxu0 0.0
    %113 = vmatprep.subr.mxu0 0.0
    %114 = vmatpush1.msra.mxu0 0.0
    %115 = vmatprep.subr.mxu0 0.0
    %116 = vmatpush1.msra.mxu0 0.0
    %117 = vmatprep.subr.mxu0 0.0
    %118 = vmatpush1.msra.mxu0 0.0
    %119 = vmatprep.subr.mxu0 0.0
    %120 = vmatpush1.msra.mxu0 0.0
    %121 = vmatprep.subr.mxu0 0.0
    %122 = vmatpush1.msra.mxu0 0.0
    %123 = vmatprep.subr.mxu0 0.0
    %124 = vmatpush1.msra.mxu0 0.0
    %125 = vmatprep.mubr.f32.mxu0 0.0
    %126 = vmatmul.mubr.f32.gmra.mrb[0].mxu0 %v42
    %v127 = vpop.f32.mrb[0].mxu0
    %v128 = vadd.f32 0.0, %v127
    %v129 = vpop.f32.mrb[0].mxu0
    %130 = vdwg.mxu0
    %v131 = vsub.f32 %v128, %v59
    %v132 = vld [vmem:[#allocation2] sm:$0xff]
    %v133 = vld [vmem:[#allocation2 + $0x8] sm:$0xff]
    %v134 = vld [vmem:[#allocation2 + $0x10] sm:$0xff]
    %v135 = vld [vmem:[#allocation2 + $0x18] sm:$0xff]
    %v136 = vld [vmem:[#allocation2 + $0x20] sm:$0xff]
    %v137 = vld [vmem:[#allocation2 + $0x28] sm:$0xff]
    %v138 = vld [vmem:[#allocation2 + $0x30] sm:$0xff]
    %v139 = vld [vmem:[#allocation2 + $0x38] sm:$0xff]
    %v140 = vld [vmem:[#allocation2 + $0x40] sm:$0xff]
    %v141 = vld [vmem:[#allocation2 + $0x48] sm:$0xff]
    %v142 = vld [vmem:[#allocation2 + $0x50] sm:$0xff]
    %v143 = vld [vmem:[#allocation2 + $0x58] sm:$0xff]
    %v144 = vld [vmem:[#allocation2 + $0x60] sm:$0xff]
    %v145 = vld [vmem:[#allocation2 + $0x68] sm:$0xff]
    %v146 = vld [vmem:[#allocation2 + $0x70] sm:$0xff]
    %v147 = vld [vmem:[#allocation2 + $0x78] sm:$0xff]
    %148 = vmatprep.subr.mxu0 0.0
    %149 = vmatpush1.msra.mxu0 %v132
    %150 = vmatprep.subr.mxu0 0.0
    %151 = vmatpush1.msra.mxu0 %v133
    %152 = vmatprep.subr.mxu0 0.0
    %153 = vmatpush1.msra.mxu0 %v134
    %154 = vmatprep.subr.mxu0 0.0
    %155 = vmatpush1.msra.mxu0 %v135
    %156 = vmatprep.subr.mxu0 0.0
    %157 = vmatpush1.msra.mxu0 %v136
    %158 = vmatprep.subr.mxu0 0.0
    %159 = vmatpush1.msra.mxu0 %v137
    %160 = vmatprep.subr.mxu0 0.0
    %161 = vmatpush1.msra.mxu0 %v138
    %162 = vmatprep.subr.mxu0 0.0
    %163 = vmatpush1.msra.mxu0 %v139
    %164 = vmatprep.subr.mxu0 0.0
    %165 = vmatpush1.msra.mxu0 %v140
    %166 = vmatprep.subr.mxu0 0.0
    %167 = vmatpush1.msra.mxu0 %v141
    %168 = vmatprep.subr.mxu0 0.0
    %169 = vmatpush1.msra.mxu0 %v142
    %170 = vmatprep.subr.mxu0 0.0
    %171 = vmatpush1.msra.mxu0 %v143
    %172 = vmatprep.subr.mxu0 0.0
    %173 = vmatpush1.msra.mxu0 %v144
    %174 = vmatprep.subr.mxu0 0.0
    %175 = vmatpush1.msra.mxu0 %v145
    %176 = vmatprep.subr.mxu0 0.0
    %177 = vmatpush1.msra.mxu0 %v146
    %178 = vmatprep.subr.mxu0 0.0
    %179 = vmatpush1.msra.mxu0 %v147
    %180 = vmatprep.subr.mxu0 0.0
    %181 = vmatpush1.msra.mxu0 0.0
    %182 = vmatprep.subr.mxu0 0.0
    %183 = vmatpush1.msra.mxu0 0.0
    %184 = vmatprep.subr.mxu0 0.0
    %185 = vmatpush1.msra.mxu0 0.0
    %186 = vmatprep.subr.mxu0 0.0
    %187 = vmatpush1.msra.mxu0 0.0
    %188 = vmatprep.subr.mxu0 0.0
    %189 = vmatpush1.msra.mxu0 0.0
    %190 = vmatprep.subr.mxu0 0.0
    %191 = vmatpush1.msra.mxu0 0.0
    %192 = vmatprep.subr.mxu0 0.0
    %193 = vmatpush1.msra.mxu0 0.0
    %194 = vmatprep.subr.mxu0 0.0
    %195 = vmatpush1.msra.mxu0 0.0
    %196 = vmatprep.subr.mxu0 0.0
    %197 = vmatpush1.msra.mxu0 0.0
    %198 = vmatprep.subr.mxu0 0.0
    %199 = vmatpush1.msra.mxu0 0.0
    %200 = vmatprep.subr.mxu0 0.0
    %201 = vmatpush1.msra.mxu0 0.0
    %202 = vmatprep.subr.mxu0 0.0
    %203 = vmatpush1.msra.mxu0 0.0
    %204 = vmatprep.subr.mxu0 0.0
    %205 = vmatpush1.msra.mxu0 0.0
    %206 = vmatprep.subr.mxu0 0.0
    %207 = vmatpush1.msra.mxu0 0.0
    %208 = vmatprep.subr.mxu0 0.0
    %209 = vmatpush1.msra.mxu0 0.0
    %210 = vmatprep.subr.mxu0 0.0
    %211 = vmatpush1.msra.mxu0 0.0
    %212 = vmatprep.mubr.f32.mxu0 0.0
    %213 = vmatmul.mubr.f32.gmra.mrb[0].mxu0 %v131
    %v214 = vpop.f32.mrb[0].mxu0
    %v215 = vadd.f32 0.0, %v214
    %v216 = vpop.f32.mrb[0].mxu0
    %217 = vdwg.mxu0
    %v218 = vsub.f32 %v42, %v215
    %vm219 = vcmp.gt.f32.partialorder %v60, 0.0
    %v220 = vmax.f32 %v218, 0.0
    %v221 = vsel %vm219, 1, 0
    %v222 = vlaneseq
    %v223 = vshrl.u32 %v222, 7
    %v224 = vsub.s32 0, %v223
    %v225 = vrot.slane %v221, %v224
    %vm226 = vcmp.eq.s32.totalorder %v225, 1
    %v227 = vsel %vm226, %v220, %v218
    %228 = vst [vmem:[%s6] sm:$0xff] %v227
    %229 = vmatprep.subr.mxu0 0.0
    %230 = vmatpush1.msra.mxu0 %v43
    %231 = vmatprep.subr.mxu0 0.0
    %232 = vmatpush1.msra.mxu0 %v44
    %233 = vmatprep.subr.mxu0 0.0
    %234 = vmatpush1.msra.mxu0 %v45
    %235 = vmatprep.subr.mxu0 0.0
    %236 = vmatpush1.msra.mxu0 %v46
    %237 = vmatprep.subr.mxu0 0.0
    %238 = vmatpush1.msra.mxu0 %v47
    %239 = vmatprep.subr.mxu0 0.0
    %240 = vmatpush1.msra.mxu0 %v48
    %241 = vmatprep.subr.mxu0 0.0
    %242 = vmatpush1.msra.mxu0 %v49
    %243 = vmatprep.subr.mxu0 0.0
    %244 = vmatpush1.msra.mxu0 %v50
    %245 = vmatprep.subr.mxu0 0.0
    %246 = vmatpush1.msra.mxu0 %v51
    %247 = vmatprep.subr.mxu0 0.0
    %248 = vmatpush1.msra.mxu0 %v52
    %249 = vmatprep.subr.mxu0 0.0
    %250 = vmatpush1.msra.mxu0 %v53
    %251 = vmatprep.subr.mxu0 0.0
    %252 = vmatpush1.msra.mxu0 %v54
    %253 = vmatprep.subr.mxu0 0.0
    %254 = vmatpush1.msra.mxu0 %v55
    %255 = vmatprep.subr.mxu0 0.0
    %256 = vmatpush1.msra.mxu0 %v56
    %257 = vmatprep.subr.mxu0 0.0
    %258 = vmatpush1.msra.mxu0 %v57
    %259 = vmatprep.subr.mxu0 0.0
    %260 = vmatpush1.msra.mxu0 %v58
    %261 = vmatprep.subr.mxu0 0.0
    %262 = vmatpush1.msra.mxu0 0.0
    %263 = vmatprep.subr.mxu0 0.0
    %264 = vmatpush1.msra.mxu0 0.0
    %265 = vmatprep.subr.mxu0 0.0
    %266 = vmatpush1.msra.mxu0 0.0
    %267 = vmatprep.subr.mxu0 0.0
    %268 = vmatpush1.msra.mxu0 0.0
    %269 = vmatprep.subr.mxu0 0.0
    %270 = vmatpush1.msra.mxu0 0.0
    %271 = vmatprep.subr.mxu0 0.0
    %272 = vmatpush1.msra.mxu0 0.0
    %273 = vmatprep.subr.mxu0 0.0
    %274 = vmatpush1.msra.mxu0 0.0
    %275 = vmatprep.subr.mxu0 0.0
    %276 = vmatpush1.msra.mxu0 0.0
    %277 = vmatprep.subr.mxu0 0.0
    %278 = vmatpush1.msra.mxu0 0.0
    %279 = vmatprep.subr.mxu0 0.0
    %280 = vmatpush1.msra.mxu0 0.0
    %281 = vmatprep.subr.mxu0 0.0
    %282 = vmatpush1.msra.mxu0 0.0
    %283 = vmatprep.subr.mxu0 0.0
    %284 = vmatpush1.msra.mxu0 0.0
    %285 = vmatprep.subr.mxu0 0.0
    %286 = vmatpush1.msra.mxu0 0.0
    %287 = vmatprep.subr.mxu0 0.0
    %288 = vmatpush1.msra.mxu0 0.0
    %289 = vmatprep.subr.mxu0 0.0
    %290 = vmatpush1.msra.mxu0 0.0
    %291 = vmatprep.subr.mxu0 0.0
    %292 = vmatpush1.msra.mxu0 0.0
    %293 = vmatprep.mubr.f32.mxu0 0.0
    %294 = vmatmul.mubr.f32.gmra.mrb[0].mxu0 %v227
    %v295 = vpop.f32.mrb[0].mxu0
    %v296 = vadd.f32 0.0, %v295
    %v297 = vpop.f32.mrb[0].mxu0
    %298 = vdwg.mxu0
    %v299 = vsub.f32 %v296, %v59
    %v300 = vmul.f32 %v299, %v299
    %301 = vadd.xlane.f32.xlu0 %v300
    %v302 = vpop.xlane.xlu0 %301
    %v303 = vrsqrt.pop %v302
    %v304 = vmul.f32 %v302, %v303
    %vm305 = vcmp.eq.f32.partialorder %v302, inf
    %v306 = vsel %vm305, %v302, %v304
    %vm307 = vcmp.eq.f32.partialorder %v302, 0.0
    %v308 = vand.u32 %v302, 2147483648
    %v309 = vsel %vm307, %v308, %v306
    %v310 = vld [vmem:[%s5] sm:$0xff]
    %v311 = vmul.f32 %v309, %v310
    %vm312 = vcmask 7168
    %313 = vst.msk [vmem:[#allocation5] sm:$0xff] %vm312, %v311
    %v314 = vsub.f32 0.0, %v227
    %v315 = vmax.f32 %v314, 0.0
    %v317 = vlaneseq
    %v318 = vshrl.u32 %v317, 7
    %v319 = vsub.s32 0, %v318
    %v320 = vrot.slane %v60, %v319
    %v322 = vmul.f32 %v315, %v320
    %v323 = vmul.f32 %v322, %v322
    %324 = vadd.xlane.f32.xlu0 %v323
    %v325 = vpop.xlane.xlu0 %324
    %v326 = vrsqrt.pop %v325
    %v327 = vmul.f32 %v325, %v326
    %vm328 = vcmp.eq.f32.partialorder %v325, inf
    %v329 = vsel %vm328, %v325, %v327
    %vm330 = vcmp.eq.f32.partialorder %v325, 0.0
    %v331 = vand.u32 %v325, 2147483648
    %v332 = vsel %vm330, %v331, %v329
    %333 = vst.msk [vmem:[#allocation6] sm:$0xff] %vm312, %v332
    // Predicated region
    $region30: #{body.3} parent=1 // pred_check
      _
    $region31: #{body.3} parent=1 // pred_check_branch
      %335 = sbr.rel (0) target = $region33
    $region32: #{body.3} parent=1 // pred_region
      _
    $region33: #{body.3} parent=1 // pred_fallthru
      _
    // Predicated region
    $region34: #{body.3} parent=1 // pred_check
      _
    $region35: #{body.3} parent=1 // pred_check_branch
      %337 = sbr.rel (0) target = $region37
    $region36: #{body.3} parent=1 // pred_region
      %s339 = ssub.s32 128, 128
      %340 = vsyncadd [#allocation4], %s339
      %s342 = sshll.u32 [#allocation5], 4
      %s343 = int_to_ptr.vmem [resolvable:$true] %s342
      %345 = dma.vmem_to_hbm [thread:$0]  %s343, 128, %s7, [#allocation4]
    $region37: #{body.3} parent=1 // pred_fallthru
      _
    // Predicated region
    $region38: #{body.3} parent=1 // pred_check
      _
    $region39: #{body.3} parent=1 // pred_check_branch
      %347 = sbr.rel (0) target = $region41
    $region40: #{body.3} parent=1 // pred_region
      %s349 = ssub.s32 128, 128
      %350 = vsyncadd [#allocation7], %s349
      %s352 = sshll.u32 [#allocation6], 4
      %s353 = int_to_ptr.vmem [resolvable:$true] %s352
      %355 = dma.vmem_to_hbm [thread:$0]  %s353, 128, %s8, [#allocation7]
    $region41: #{body.3} parent=1 // pred_fallthru
      _
    // Predicated region
    $region42: #{body.3} parent=1 // pred_check
      _
    $region43: #{body.3} parent=1 // pred_check_branch
      %357 = sbr.rel (0) target = $region45
    $region44: #{body.3} parent=1 // pred_region
      _
    $region45: #{body.3} parent=1 // pred_fallthru
      _
    // Predicated region
    $region46: #{body.3} parent=1 // pred_check
      _
    $region47: #{body.3} parent=1 // pred_check_branch
      %359 = sbr.rel (0) target = $region49
    $region48: #{body.3} parent=1 // pred_region
      %360 = dma.done [#allocation4], 128
    $region49: #{body.3} parent=1 // pred_fallthru
      _
    // Predicated region
    $region50: #{body.3} parent=1 // pred_check
      _
    $region51: #{body.3} parent=1 // pred_check_branch
      %362 = sbr.rel (0) target = $region53
    $region52: #{body.3} parent=1 // pred_region
      %363 = dma.done [#allocation7], 128
    $region53: #{body.3} parent=1 // pred_fallthru
      _
    %364 = vsyncpa [#allocation3], 1
    %365 = vsyncpa [#allocation4], 1
    %366 = vsyncpa [#allocation7], 1

</llo_original>
